<compile_context>
chip_gen: v5e
topology: v5e:2x2
jax: 0.10.0
libtpu: 0.0.40
codegen_flags: <defaults>
</compile_context>

<pallas_src>
import jax
import jax.numpy as jnp
from jax import lax
from jax.experimental import pallas as pl
from jax.experimental.pallas import tpu as pltpu

EPS = 1e-14  # matches the PyTorch module (float32 semantics)


def _round_up(a, b):
    return -(-a // b) * b


def _cdiv(a, b):
    return -(-a // b)


def _make_kernel(*, B, N, R, C, GR, CB, gamma, mask_rows, mask_cols,
                 dynamic_rows):
    """Build the kernel with all tiling decisions baked in as Python statics."""
    n_strips_static = R // GR

    def kernel(x_ref, t_ref, o_ref):
        row_base = pl.program_id(0) * R
        col_base = pl.program_id(1) * C

        # Loop-invariant iotas, hoisted out of the strip loop (only emitted
        # when the shape actually has a remainder).
        row_iota = (lax.broadcasted_iota(jnp.int32, (GR, C), 0)
                    if mask_rows else None)
        col_ok = ((col_base + lax.broadcasted_iota(jnp.int32, (GR, C), 1)) < N
                  if mask_cols else None)

        def strip(g, acc):
            r0 = pl.multiple_of(g * GR, GR)
            x = x_ref[pl.ds(r0, GR), :].astype(jnp.float32)
            t = t_ref[pl.ds(r0, GR), :].astype(jnp.float32)
            pos = t == 1.0
            omx = 1.0 - x                      # hoisted; reused by both selects
            p = jnp.where(pos, x, omx)         # probability assigned to label
            q = jnp.where(pos, omx, x)         # focal modulation base
            qg = q * q if gamma == 2 else q ** gamma
            term = qg * jnp.log(p + EPS)       # single EUP log; negated in wrapper
            ok = None
            if mask_rows:
                ok = (row_base + g * GR + row_iota) < B
            if mask_cols:
                ok = col_ok if ok is None else jnp.logical_and(ok, col_ok)
            if ok is not None:
                term = jnp.where(ok, term, 0.0)
            return acc + term

        acc0 = jnp.zeros((GR, C), jnp.float32)
        if dynamic_rows:
            # Last row block is partial: only walk strips that contain data.
            rows_here = jnp.minimum(R, B - row_base)
            n_strips = (rows_here + GR - 1) // GR
            acc = lax.fori_loop(0, n_strips, strip, acc0)
        else:
            acc = lax.fori_loop(0, n_strips_static, strip, acc0)

        if CB == 1:
            o_ref[...] = acc[None]
        else:
            @pl.when(pl.program_id(1) == 0)
            def _():
                o_ref[...] = jnp.zeros_like(o_ref)
            o_ref[...] += acc[None]

    return kernel


def bce_focal_loss(inputs, targets, *, gamma=2,
                   target_tile_bytes=16 << 20,
                   vmem_limit_bytes=48 << 20):
    """mean over batch of per-row-summed BCE focal loss (reduction='mean').

    inputs:  (B, N) probabilities in [0, 1] (e.g. sigmoid outputs).
    targets: (B, N), positives encoded exactly as 1 (f32 / bf16 / int8 all ok).
    Tip: passing inputs as bf16 and targets as int8 halves HBM traffic; the
    kernel casts to f32 internally.
    """
    B, N = inputs.shape
    assert targets.shape == (B, N)

    isx = jnp.dtype(inputs.dtype).itemsize
    ist = jnp.dtype(targets.dtype).itemsize
    # Row-strip granularity = sublane packing multiple of the narrowest dtype
    # (f32 -> 8, bf16 -> 16, int8 -> 32) so in-kernel row slices stay aligned.
    GR = max(8, 32 // isx, 32 // ist)

    # Column (lane) tiling: full width when it fits (no lane padding/masking at
    # all), else near-even splits in multiples of 128 (remainder < 128 lanes).
    max_col = max(256, 8192 // GR)       # keeps per-strip f32 temps ~8 vregs
    if N <= max_col:
        C = N
    else:
        C = _round_up(_cdiv(N, _cdiv(N, max_col)), 128)
    CB = _cdiv(N, C)

    # Row tiling: dtype-aware HBM byte budget per grid step across BOTH
    # operands (amortizes the ~0.35us/step pipeline overhead).
    bytes_per_row = C * (isx + ist)
    R_budget = max(GR, (target_tile_bytes // bytes_per_row) // GR * GR)
    R = min(R_budget, max(GR, (B // GR) * GR))
    RB = _cdiv(B, R)

    dynamic_rows = (B % R) != 0                   # last row block is partial
    mask_rows = dynamic_rows and (B % GR) != 0    # last strip is partial
    mask_cols = (N % C) != 0                      # last column block is partial

    kernel = _make_kernel(B=B, N=N, R=R, C=C, GR=GR, CB=CB, gamma=gamma,
                          mask_rows=mask_rows, mask_cols=mask_cols,
                          dynamic_rows=dynamic_rows)

    partials = pl.pallas_call(
        kernel,
        out_shape=jax.ShapeDtypeStruct((RB, GR, C), jnp.float32),
        grid_spec=pltpu.PrefetchScalarGridSpec(
            num_scalar_prefetch=0,
            grid=(RB, CB),
            in_specs=[
                pl.BlockSpec((R, C), lambda i, j: (i, j)),
                pl.BlockSpec((R, C), lambda i, j: (i, j)),
            ],
            out_specs=pl.BlockSpec((1, GR, C), lambda i, j: (i, 0, 0)),
        ),
        compiler_params=pltpu.CompilerParams(
            dimension_semantics=("parallel", "arbitrary"),
            vmem_limit_bytes=vmem_limit_bytes,
        ),
    )(inputs, targets)

    # Single cross-lane/sublane reduce, hoisted global negate, mean over B.
    return -jnp.sum(partials) / jnp.float32(B)


def bce_focal_loss_ref(inputs, targets, gamma=2):
    """Pure-JAX reference matching the PyTorch module (reduction='mean')."""
    x = inputs.astype(jnp.float32)
    pos_id = (targets == 1.0).astype(jnp.float32)
    neg_id = 1.0 - pos_id
    pos_loss = -pos_id * (1.0 - x) ** gamma * jnp.log(x + EPS)
    neg_loss = -neg_id * x ** gamma * jnp.log(1.0 - x + EPS)
    return jnp.mean(jnp.sum(pos_loss + neg_loss, axis=1))


if __name__ == "__main__":
    key = jax.random.PRNGKey(0)
    k1, k2, k3, k4 = jax.random.split(key, 4)

    # Small aligned case (fast path: no masks).
    B, N = 16, 256
    inputs = jax.nn.sigmoid(jax.random.normal(k1, (B, N), dtype=jnp.float32))
    targets = (jax.random.uniform(k2, (B, N)) > 0.5).astype(jnp.float32)
    loss = jax.block_until_ready(bce_focal_loss(inputs, targets))
    ref = bce_focal_loss_ref(inputs, targets)
    assert jnp.allclose(loss, ref, rtol=1e-4, atol=1e-5), (loss, ref)

    # Unaligned case exercising the in-kernel remainder masking (no host pad).
    B2, N2 = 13, 300
    inputs2 = jax.nn.sigmoid(jax.random.normal(k3, (B2, N2), dtype=jnp.float32))
    targets2 = (jax.random.uniform(k4, (B2, N2)) > 0.5).astype(jnp.float32)
    loss2 = jax.block_until_ready(bce_focal_loss(inputs2, targets2))
    ref2 = bce_focal_loss_ref(inputs2, targets2)
    assert jnp.allclose(loss2, ref2, rtol=1e-4, atol=1e-5), (loss2, ref2)

    print("KERNEL_OK")
</pallas_src>

<mosaic_0001>
module attributes {stable_mosaic.version = 11 : i64} {
  func.func @kernel(%arg0: i32, %arg1: i32, %arg2: memref<16x256xf32, #tpu.memory_space<vmem>>, %arg3: memref<16x256xf32, #tpu.memory_space<vmem>>, %arg4: memref<1x8x256xf32, #tpu.memory_space<vmem>>) attributes {dimension_semantics = [#tpu.dimension_semantics<parallel>, #tpu.dimension_semantics<arbitrary>], iteration_bounds = array<i64: 1, 1>, scalar_prefetch = 0 : i64, scratch_operands = 0 : i64, tpu.core_type = #tpu.core_type<tc>, window_params = [{transform_indices = @transform_0, window_bounds = array<i64: 16, 256>}, {transform_indices = @transform_1, window_bounds = array<i64: 16, 256>}, {transform_indices = @transform_2, window_bounds = array<i64: 1, 8, 256>}]} {
    %cst = arith.constant 0.000000e+00 : f32
    %0 = vector.broadcast %cst : f32 to vector<8x256xf32>
    %c0_i32 = arith.constant 0 : i32
    %c2_i32 = arith.constant 2 : i32
    %1 = arith.addi %c0_i32, %c2_i32 : i32
    %c1_i32 = arith.constant 1 : i32
    %2 = scf.for %arg5 = %c0_i32 to %1 step %c1_i32 iter_args(%arg6 = %0) -> (vector<8x256xf32>)  : i32 {
      %c8_i32 = arith.constant 8 : i32
      %5 = arith.muli %arg5, %c8_i32 : i32
      %6 = tpu.assume_multiple %5, 8 : i32
      %7 = arith.index_cast %6 : i32 to index
      %c0_3 = arith.constant 0 : index
      %8 = vector.load %arg2[%7, %c0_3] : memref<16x256xf32, #tpu.memory_space<vmem>>, vector<8x256xf32>
      %9 = arith.index_cast %6 : i32 to index
      %c0_4 = arith.constant 0 : index
      %10 = vector.load %arg3[%9, %c0_4] : memref<16x256xf32, #tpu.memory_space<vmem>>, vector<8x256xf32>
      %cst_5 = arith.constant 1.000000e+00 : f32
      %11 = vector.broadcast %cst_5 : f32 to vector<8x256xf32>
      %12 = arith.cmpf oeq, %10, %11 : vector<8x256xf32>
      %cst_6 = arith.constant 1.000000e+00 : f32
      %13 = vector.broadcast %cst_6 : f32 to vector<8x256xf32>
      %14 = arith.subf %13, %8 : vector<8x256xf32>
      %15 = arith.select %12, %8, %14 : vector<8x256xi1>, vector<8x256xf32>
      %16 = arith.select %12, %14, %8 : vector<8x256xi1>, vector<8x256xf32>
      %17 = arith.mulf %16, %16 : vector<8x256xf32>
      %cst_7 = arith.constant 9.99999982E-15 : f32
      %18 = vector.broadcast %cst_7 : f32 to vector<8x256xf32>
      %19 = arith.addf %15, %18 : vector<8x256xf32>
      %20 = math.log %19 : vector<8x256xf32>
      %21 = arith.mulf %17, %20 : vector<8x256xf32>
      %22 = arith.addf %arg6, %21 : vector<8x256xf32>
      scf.yield %22 : vector<8x256xf32>
    }
    %c2_i32_0 = arith.constant 2 : i32
    %3 = vector.shape_cast %2 : vector<8x256xf32> to vector<1x8x256xf32>
    %c0 = arith.constant 0 : index
    %c0_1 = arith.constant 0 : index
    %c0_2 = arith.constant 0 : index
    %4 = vector.load %arg4[%c0, %c0_1, %c0_2] : memref<1x8x256xf32, #tpu.memory_space<vmem>>, vector<1x8x256xf32>
    tpu.vector_store %arg4[%c0, %c0_1, %c0_2], %3 {strides = array<i32>} : memref<1x8x256xf32, #tpu.memory_space<vmem>>, vector<1x8x256xf32>,
    return
  }
  func.func @transform_0(%arg0: i32, %arg1: i32) -> (i32, i32) {
    %c0_i32 = arith.constant 0 : i32
    return %arg0, %arg1 : i32, i32
  }
  func.func @transform_1(%arg0: i32, %arg1: i32) -> (i32, i32) {
    %c0_i32 = arith.constant 0 : i32
    return %arg0, %arg1 : i32, i32
  }
  func.func @transform_2(%arg0: i32, %arg1: i32) -> (i32, i32, i32) {
    %c0_i32 = arith.constant 0 : i32
    %c0_i32_0 = arith.constant 0 : i32
    %c0_i32_1 = arith.constant 0 : i32
    return %arg0, %c0_i32, %c0_i32_0 : i32, i32, i32
  }
}

</mosaic_0001>

<llo_original>
// kernel: tpu_custom_call.1
$region0: #{tpu_custom_call.1}
  #allocation0 [shape = 'u32[]', space=smem, size = 0x4, offset = 0x4, fixed_abs, tag = 'smem constant byte address 0x4 - core index']
  #allocation1 [shape = 'u32[72,128]{1,0:T(1,128)}', space=vmem, size = 0x9000, scoped, tag = 'internal scratch']
  %s0 = inlined_call_operand.hbm [shape: f32[16,256], index: 0, kind: input, shape index: {}]
  %s1 = inlined_call_operand.hbm [shape: f32[16,256], index: 1, kind: input, shape index: {}]
  %s2 = inlined_call_operand.hbm [shape: f32[1,8,256], index: 2, kind: output, shape index: {}]
  %s3 = sld [smem:[#allocation0]]
  $region33: #{tpu_custom_call.1} parent=0
    _
  %s5 = ssub.s32 1, %s3
  %s6 = scalar_select 0, %s5, %s3
  $region1: #{tpu_custom_call.1} parent=0
    #allocation2 [shape = 'u8[16384]{0}', space=vmem, size = 0x4000, scoped, tag = 'input window, operand 0, single buffered']
    #allocation3 [shape = 's32[1]{0}', space=sflag, size = 0x4, scoped, tag = 'scoped memory for tpu_custom_call.1']
    #allocation4 [shape = 's32[1]{0}', space=sflag, size = 0x4, scoped, tag = 'scoped memory for tpu_custom_call.1']
    #allocation5 [shape = 'u8[16384]{0}', space=vmem, size = 0x4000, scoped, tag = 'input window, operand 1, single buffered']
    #allocation6 [shape = 's32[1]{0}', space=sflag, size = 0x4, scoped, tag = 'scoped memory for tpu_custom_call.1']
    #allocation7 [shape = 'u8[8192]{0}', space=vmem, size = 0x2000, scoped, tag = 'output window, operand 0, single buffered']
    %7 = vsyncpa [#allocation3], 0
    %8 = vsyncpa [#allocation6], 0
    %9 = vsyncpa [#allocation4], 0
    // Predicated region
    $region2: #{tpu_custom_call.1} parent=1 // pred_check
      _
    $region3: #{tpu_custom_call.1} parent=1 // pred_check_branch
      %11 = sbr.rel (0) target = $region5
    $region4: #{tpu_custom_call.1} parent=1 // pred_region
      %13 = vsyncadd [#allocation3], 0
      %s14 = sshll.u32 %s0, 4
      %s15 = int_to_ptr.hbm [resolvable:$true] %s14
      %s16 = sshll.u32 [#allocation2], 4
      %s17 = int_to_ptr.vmem [resolvable:$true] %s16
      %22 = dma.hbm_to_vmem [thread:$0]  %s15, 512, %s17, [#allocation3], 256, 256, 16
    $region5: #{tpu_custom_call.1} parent=1 // pred_fallthru
      _
    // Predicated region
    $region6: #{tpu_custom_call.1} parent=1 // pred_check
      _
    $region7: #{tpu_custom_call.1} parent=1 // pred_check_branch
      %24 = sbr.rel (0) target = $region9
    $region8: #{tpu_custom_call.1} parent=1 // pred_region
      %26 = vsyncadd [#allocation6], 0
      %s27 = sshll.u32 %s1, 4
      %s28 = int_to_ptr.hbm [resolvable:$true] %s27
      %s29 = sshll.u32 [#allocation5], 4
      %s30 = int_to_ptr.vmem [resolvable:$true] %s29
      %35 = dma.hbm_to_vmem [thread:$0]  %s28, 512, %s30, [#allocation6], 256, 256, 16
    $region9: #{tpu_custom_call.1} parent=1 // pred_fallthru
      _
    // Predicated region
    $region10: #{tpu_custom_call.1} parent=1 // pred_check
      _
    $region11: #{tpu_custom_call.1} parent=1 // pred_check_branch
      %37 = sbr.rel (0) target = $region13
    $region12: #{tpu_custom_call.1} parent=1 // pred_region
      %39 = dma.done [#allocation3], 512
    $region13: #{tpu_custom_call.1} parent=1 // pred_fallthru
      _
    // Predicated region
    $region14: #{tpu_custom_call.1} parent=1 // pred_check
      _
    $region15: #{tpu_custom_call.1} parent=1 // pred_check_branch
      %41 = sbr.rel (0) target = $region17
    $region16: #{tpu_custom_call.1} parent=1 // pred_region
      %43 = dma.done [#allocation6], 512
    $region17: #{tpu_custom_call.1} parent=1 // pred_fallthru
      _
    loop: start=0, step=1, limit=2
    $region18: #{tpu_custom_call.1} parent=1 // loop_pre_header
      _
    $region19: #{tpu_custom_call.1} parent=1 // loop_header
      %s45 = sphi 0, %s49
      %p46 = scmp.ge.s32.totalorder %s45, 2
      %v50 = vphi 0.0, %v82
      %v51 = vphi 0.0, %v83
    $region20: #{tpu_custom_call.1} parent=1 // loop_header_branch
      %48 = sbr.rel (%p46) target = $region24
    $region21: #{tpu_custom_call.1} parent=1 // loop_body
      %s52 = smul.u32 %s45, 8
      %s53 = sshra.s32 %s52, 3
      %s54 = sand.u32 %s52, 7
      %s55 = smul.u32 %s53, 2
      %s56 = smul.addr %s55, 8
      %s57 = scalar_lea.vmem [#allocation2], %s56
      %v58 = vld [vmem:[%s57] sm:$0xff]
      %v59 = vld [vmem:[%s57 + $0x8] sm:$0xff]
      %s60 = smul.addr %s55, 8
      %s61 = scalar_lea.vmem [#allocation5], %s60
      %v62 = vld [vmem:[%s61] sm:$0xff]
      %v63 = vld [vmem:[%s61 + $0x8] sm:$0xff]
      %vm64 = vcmp.eq.f32.partialorder %v62, 1.0
      %vm65 = vcmp.eq.f32.partialorder %v63, 1.0
      %v66 = vsub.f32 1.0, %v58
      %v67 = vsub.f32 1.0, %v59
      %v68 = vsel %vm64, %v58, %v66
      %v69 = vsel %vm65, %v59, %v67
      %v70 = vsel %vm64, %v66, %v58
      %v71 = vsel %vm65, %v67, %v59
      %v72 = vmul.f32 %v70, %v70
      %v73 = vmul.f32 %v71, %v71
      %v74 = vadd.f32 %v68, 1e-14
      %v75 = vadd.f32 %v69, 1e-14
      %v76 = vlog2.pop %v74
      %v77 = vmul.f32 %v76, 0.6931472
      %v78 = vlog2.pop %v75
      %v79 = vmul.f32 %v78, 0.6931472
      %v80 = vmul.f32 %v72, %v77
      %v81 = vmul.f32 %v73, %v79
      %v82 = vadd.f32 %v50, %v80
      %v83 = vadd.f32 %v51, %v81
    $region22: #{tpu_custom_call.1} parent=1 // loop_footer
      %s49 = sadd.s32 1, %s45
    $region23: #{tpu_custom_call.1} parent=1 // loop_footer_branch
      %44 = sbr.rel target = $region19
    $region24: #{tpu_custom_call.1} parent=1 // loop_exit
      _
    %84 = vst [vmem:[#allocation7] sm:$0xff] %v50
    %85 = vst [vmem:[#allocation7 + $0x8] sm:$0xff] %v51
    // Predicated region
    $region25: #{tpu_custom_call.1} parent=1 // pred_check
      _
    $region26: #{tpu_custom_call.1} parent=1 // pred_check_branch
      %87 = sbr.rel (0) target = $region28
    $region27: #{tpu_custom_call.1} parent=1 // pred_region
      %89 = vsyncadd [#allocation4], 0
      %s91 = sshll.u32 [#allocation7], 4
      %s92 = int_to_ptr.vmem [resolvable:$true] %s91
      %s93 = sshll.u32 %s2, 4
      %s94 = int_to_ptr.hbm [resolvable:$true] %s93
      %96 = dma.vmem_to_hbm [thread:$0]  %s92, 256, %s94, [#allocation4]
    $region28: #{tpu_custom_call.1} parent=1 // pred_fallthru
      _
    // Predicated region
    $region29: #{tpu_custom_call.1} parent=1 // pred_check
      _
    $region30: #{tpu_custom_call.1} parent=1 // pred_check_branch
      %98 = sbr.rel (0) target = $region32
    $region31: #{tpu_custom_call.1} parent=1 // pred_region
      %100 = dma.done [#allocation4], 256
    $region32: #{tpu_custom_call.1} parent=1 // pred_fallthru
      _
    %101 = vsyncpa [#allocation3], 1
    %102 = vsyncpa [#allocation6], 1
    %103 = vsyncpa [#allocation4], 1

</llo_original>
